<compile_context>
chip_gen: v5e
topology: v5e:2x2
jax: 0.10.0
libtpu: 0.0.40
codegen_flags: <defaults>
</compile_context>

<pallas_src>
import functools

import jax
import jax.numpy as jnp
from jax.experimental import pallas as pl
from jax.experimental.pallas import tpu as pltpu


def _smart_persistence_kernel(irr_ref, cs_ref, out_ref, *, shift_amt):
    """One (T, L_tile) location tile: shifted read * (keep,1) masked ratio."""
    T, Lt = out_ref.shape
    keep = T - shift_amt          # rows that survive the tail-zeroing (static)

    # torch: csi[-shift:, :] = 0.  shift == 0 zeros the whole array
    # (arr[-0:] is the full array); shift >= T also zeros everything.
    if shift_amt == 0 or keep <= 0:
        out_ref[...] = jnp.zeros_like(out_ref)
        return

    # ratio[t] = cs[t] / cs[t + shift], t < T - shift   -- tiny (keep, 1) block.
    cs_num = cs_ref[pl.ds(0, keep), :]                      # (keep, 1)
    cs_den = cs_ref[pl.ds(shift_amt, keep), :]              # (keep, 1)
    ratio = cs_num * pl.reciprocal(cs_den, approx=False)    # (keep, 1)

    # out[t] = irr[t + shift] * ratio[t]  -- static shifted read, one multiply
    # per element on the streaming path.
    out_ref[pl.ds(0, keep), :] = irr_ref[pl.ds(shift_amt, keep), :] * ratio
    # zero the wrapped tail rows.
    out_ref[pl.ds(keep, shift_amt), :] = jnp.zeros((shift_amt, Lt), out_ref.dtype)


def _round_up(x, m):
    return (x + m - 1) // m * m


def smart_persistence(irr, cs, shift_amt, *, target_lanes=2048,
                      per_buffer_bytes=2 << 20):
    """irr: (T, L) float32, cs: (T, 1) float32, shift_amt: static python int >= 0."""
    T, L = irr.shape
    assert cs.shape == (T, 1)
    shift_amt = int(shift_amt)

    # Lane tile: multiple of 128, lane-dense, capped so double-buffered
    # input + output tiles stay well inside the default scoped VMEM budget on
    # every TPU generation (v5e 16 MiB / v6e 32 MiB / v7x 32 MiB of 64 MiB).
    bytes_per_lane_col = max(T * 4, 1)
    vmem_cap_lanes = max(128, (per_buffer_bytes // bytes_per_lane_col) // 128 * 128)
    lane_tile = min(_round_up(L, 128), _round_up(target_lanes, 128), vmem_cap_lanes)

    kernel = functools.partial(_smart_persistence_kernel, shift_amt=shift_amt)
    out = pl.pallas_call(
        kernel,
        out_shape=jax.ShapeDtypeStruct((T, L), irr.dtype),
        grid=(pl.cdiv(L, lane_tile),),
        in_specs=[
            pl.BlockSpec((T, lane_tile), lambda j: (0, j)),  # irr: tiled over lanes
            pl.BlockSpec((T, 1), lambda j: (0, 0)),          # cs: resident (T,1)
        ],
        out_specs=pl.BlockSpec((T, lane_tile), lambda j: (0, j)),
        compiler_params=pltpu.CompilerParams(
            # location tiles are independent -> megacore sharding on v7x
            dimension_semantics=("parallel",)),
    )(irr, cs)
    return out


def _reference(irr, cs, shift_amt):
    """Pure-JAX mirror of the torch ops (divide -> roll -> zero tail -> mul)."""
    csi = irr / cs
    csi = jnp.roll(csi, -shift_amt, axis=0)
    if shift_amt == 0:
        csi = jnp.zeros_like(csi)        # torch: csi[-0:, :] = 0 zeros everything
    else:
        csi = csi.at[-shift_amt:, :].set(0.0)
    return csi * cs


if __name__ == "__main__":
    # Small, deterministic example consistent with the module:
    #   24 hourly timesteps, 1000 locations, persistence shift of 3 hours.
    # (L = 1000 is not a multiple of 128, so the ragged final lane block path
    #  of the kernel is exercised.)
    T, L = 24, 1000
    SHIFT = 3

    key = jax.random.PRNGKey(0)

    # Synthetic clear-sky GHI curve (strictly positive, diurnal-ish), (T, 1).
    hours = jnp.arange(T, dtype=jnp.float32)
    cs = (50.0 + 800.0 * jnp.sin(jnp.pi * hours / T) ** 2).reshape(T, 1)

    # Measured irradiance = clear-sky * random clear-sky index in [0, 1.1).
    csi_true = jax.random.uniform(key, (T, L), jnp.float32, 0.0, 1.1)
    irr = (cs * csi_true).astype(jnp.float32)

    out = smart_persistence(irr, cs, SHIFT)
    out = jax.block_until_ready(out)

    ref = _reference(irr, cs, SHIFT)
    assert out.shape == (T, L) and out.dtype == jnp.float32
    assert jnp.allclose(out, ref, rtol=1e-5, atol=1e-3), "mismatch vs reference"

    print("KERNEL_OK")
</pallas_src>

<mosaic_0001>
module attributes {stable_mosaic.version = 11 : i64} {
  func.func @_smart_persistence_kernel(%arg0: i32, %arg1: memref<24x1024xf32, #tpu.memory_space<vmem>>, %arg2: memref<24x1xf32, #tpu.memory_space<vmem>>, %arg3: memref<24x1024xf32, #tpu.memory_space<vmem>>) attributes {dimension_semantics = [#tpu.dimension_semantics<parallel>], iteration_bounds = array<i64: 1>, scalar_prefetch = 0 : i64, scratch_operands = 0 : i64, tpu.core_type = #tpu.core_type<tc>, window_params = [{transform_indices = @transform_0, window_bounds = array<i64: 24, 1024>}, {pipeline_mode = #tpu.pipeline_mode<synchronous>, transform_indices = @transform_1, window_bounds = array<i64: 24, 1>}, {transform_indices = @transform_2, window_bounds = array<i64: 24, 1024>}]} {
    %c0 = arith.constant 0 : index
    %c0_0 = arith.constant 0 : index
    %0 = vector.load %arg2[%c0, %c0_0] : memref<24x1xf32, #tpu.memory_space<vmem>>, vector<21x1xf32>
    %c3 = arith.constant 3 : index
    %c0_1 = arith.constant 0 : index
    %1 = vector.load %arg2[%c3, %c0_1] : memref<24x1xf32, #tpu.memory_space<vmem>>, vector<21x1xf32>
    %2 = tpu.reciprocal %1 : vector<21x1xf32> -> vector<21x1xf32>
    %3 = arith.mulf %0, %2 : vector<21x1xf32>
    %c3_2 = arith.constant 3 : index
    %c0_3 = arith.constant 0 : index
    %4 = vector.load %arg1[%c3_2, %c0_3] : memref<24x1024xf32, #tpu.memory_space<vmem>>, vector<21x1024xf32>
    %5 = vector.broadcast %3 : vector<21x1xf32> to vector<21x1024xf32>
    %6 = arith.mulf %4, %5 : vector<21x1024xf32>
    %c0_4 = arith.constant 0 : index
    %c0_5 = arith.constant 0 : index
    %7 = vector.load %arg3[%c0_4, %c0_5] : memref<24x1024xf32, #tpu.memory_space<vmem>>, vector<21x1024xf32>
    tpu.vector_store %arg3[%c0_4, %c0_5], %6 {strides = array<i32>} : memref<24x1024xf32, #tpu.memory_space<vmem>>, vector<21x1024xf32>,
    %cst = arith.constant 0.000000e+00 : f32
    %8 = vector.broadcast %cst : f32 to vector<3x1024xf32>
    %c21 = arith.constant 21 : index
    %c0_6 = arith.constant 0 : index
    %9 = vector.load %arg3[%c21, %c0_6] : memref<24x1024xf32, #tpu.memory_space<vmem>>, vector<3x1024xf32>
    tpu.vector_store %arg3[%c21, %c0_6], %8 {strides = array<i32>} : memref<24x1024xf32, #tpu.memory_space<vmem>>, vector<3x1024xf32>,
    return
  }
  func.func @transform_0(%arg0: i32) -> (i32, i32) {
    %c0_i32 = arith.constant 0 : i32
    %c0_i32_0 = arith.constant 0 : i32
    return %c0_i32, %arg0 : i32, i32
  }
  func.func @transform_1(%arg0: i32) -> (i32, i32) {
    %c0_i32 = arith.constant 0 : i32
    %c0_i32_0 = arith.constant 0 : i32
    %c0_i32_1 = arith.constant 0 : i32
    return %c0_i32, %c0_i32_0 : i32, i32
  }
  func.func @transform_2(%arg0: i32) -> (i32, i32) {
    %c0_i32 = arith.constant 0 : i32
    %c0_i32_0 = arith.constant 0 : i32
    return %c0_i32, %arg0 : i32, i32
  }
}

</mosaic_0001>

<llo_original>
// kernel: tpu_custom_call.1
$region0: #{tpu_custom_call.1}
  #allocation0 [shape = 'u32[]', space=smem, size = 0x4, offset = 0x4, fixed_abs, tag = 'smem constant byte address 0x4 - core index']
  #allocation1 [shape = 'u32[72,128]{1,0:T(1,128)}', space=vmem, size = 0x9000, scoped, tag = 'internal scratch']
  %s0 = inlined_call_operand.hbm [shape: f32[24,1000], index: 0, kind: input, shape index: {}]
  %s1 = inlined_call_operand.vmem [shape: f32[24,1], index: 1, kind: input, shape index: {}]
  %s2 = inlined_call_operand.hbm [shape: f32[24,1000], index: 2, kind: output, shape index: {}]
  %s3 = sld [smem:[#allocation0]]
  $region22: #{tpu_custom_call.1} parent=0
    _
  %s5 = ssub.s32 1, %s3
  %s6 = scalar_select 0, %s5, %s3
  $region1: #{tpu_custom_call.1} parent=0
    #allocation2 [shape = 'u8[98304]{0}', space=vmem, size = 0x18000, scoped, tag = 'input window, operand 0, single buffered']
    #allocation3 [shape = 's32[1]{0}', space=sflag, size = 0x4, scoped, tag = 'scoped memory for tpu_custom_call.1']
    #allocation4 [shape = 's32[1]{0}', space=sflag, size = 0x4, scoped, tag = 'scoped memory for tpu_custom_call.1']
    #allocation5 [shape = 'u8[98304]{0}', space=vmem, size = 0x18000, scoped, tag = 'output window, operand 0, single buffered']
    %7 = vsyncpa [#allocation3], 0
    %8 = vsyncpa [#allocation4], 0
    // Predicated region
    $region2: #{tpu_custom_call.1} parent=1 // pred_check
      _
    $region3: #{tpu_custom_call.1} parent=1 // pred_check_branch
      %10 = sbr.rel (0) target = $region5
    $region4: #{tpu_custom_call.1} parent=1 // pred_region
      %12 = vsyncadd [#allocation3], 0
      %s13 = sshll.u32 %s0, 4
      %s14 = int_to_ptr.hbm [resolvable:$true] %s13
      %s15 = sshll.u32 [#allocation2], 4
      %s16 = int_to_ptr.vmem [resolvable:$true] %s15
      %21 = dma.hbm_to_vmem [thread:$0]  %s14, 3072, %s16, [#allocation3], 1024, 1024, 64
    $region5: #{tpu_custom_call.1} parent=1 // pred_fallthru
      _
    // Predicated region
    $region6: #{tpu_custom_call.1} parent=1 // pred_check
      _
    $region7: #{tpu_custom_call.1} parent=1 // pred_check_branch
      %23 = sbr.rel (0) target = $region9
    $region8: #{tpu_custom_call.1} parent=1 // pred_region
      _
    $region9: #{tpu_custom_call.1} parent=1 // pred_fallthru
      _
    // Predicated region
    $region10: #{tpu_custom_call.1} parent=1 // pred_check
      _
    $region11: #{tpu_custom_call.1} parent=1 // pred_check_branch
      %25 = sbr.rel (0) target = $region13
    $region12: #{tpu_custom_call.1} parent=1 // pred_region
      %27 = dma.done [#allocation3], 3072
    $region13: #{tpu_custom_call.1} parent=1 // pred_fallthru
      _
    %v28 = vld [vmem:[%s1] sm:$0xff]
    %v29 = vld [vmem:[%s1 + $0x8] sm:$0xff]
    %v30 = vld [vmem:[%s1 + $0x10] sm:$0x1f]
    %v31 = vld [vmem:[%s1 + $0x3] sm:$0xff]
    %v32 = vld [vmem:[%s1 + $0xb] sm:$0xff]
    %v33 = vld [vmem:[%s1 + $0x13] sm:$0x1f]
    %v34 = vrcp.pop %v31
    %v35 = vmul.f32 %v31, %v34
    %v36 = vsub.f32 1.0, %v35
    %v37 = vmul.f32 %v34, %v36
    %v38 = vadd.f32 %v34, %v37
    %vm39 = vweird.f32 %v31
    %vm40 = vweird.f32 %v34
    %vm41 = vmor %vm39, %vm40
    %v42 = vsel %vm41, %v34, %v38
    %v43 = vand.u32 2147483647, %v31
    %vm44 = vcmp.eq.f32.partialorder %v43, 8.507059e+37
    %v45 = vand.u32 %v31, 2147483648
    %v46 = vor.u32 1.1754944e-38, %v45
    %v47 = vsel %vm44, %v46, %v42
    %v48 = vrcp.pop %v32
    %v49 = vmul.f32 %v32, %v48
    %v50 = vsub.f32 1.0, %v49
    %v51 = vmul.f32 %v48, %v50
    %v52 = vadd.f32 %v48, %v51
    %vm53 = vweird.f32 %v32
    %vm54 = vweird.f32 %v48
    %vm55 = vmor %vm53, %vm54
    %v56 = vsel %vm55, %v48, %v52
    %v57 = vand.u32 2147483647, %v32
    %vm58 = vcmp.eq.f32.partialorder %v57, 8.507059e+37
    %v59 = vand.u32 %v32, 2147483648
    %v60 = vor.u32 1.1754944e-38, %v59
    %v61 = vsel %vm58, %v60, %v56
    %v62 = vrcp.pop %v33
    %v63 = vmul.f32 %v33, %v62
    %v64 = vsub.f32 1.0, %v63
    %v65 = vmul.f32 %v62, %v64
    %v66 = vadd.f32 %v62, %v65
    %vm67 = vweird.f32 %v33
    %vm68 = vweird.f32 %v62
    %vm69 = vmor %vm67, %vm68
    %v70 = vsel %vm69, %v62, %v66
    %v71 = vand.u32 2147483647, %v33
    %vm72 = vcmp.eq.f32.partialorder %v71, 8.507059e+37
    %v73 = vand.u32 %v33, 2147483648
    %v74 = vor.u32 1.1754944e-38, %v73
    %v75 = vsel %vm72, %v74, %v70
    %v76 = vmul.f32 %v28, %v47
    %v77 = vmul.f32 %v29, %v61
    %v78 = vmul.f32 %v30, %v75
    %v79 = vld [vmem:[#allocation2] sm:$0xf8]
    %v80 = vld [vmem:[#allocation2 + $0x8] sm:$0xf8]
    %v81 = vld [vmem:[#allocation2 + $0x10] sm:$0xf8]
    %v82 = vld [vmem:[#allocation2 + $0x18] sm:$0xf8]
    %v83 = vld [vmem:[#allocation2 + $0x20] sm:$0xf8]
    %v84 = vld [vmem:[#allocation2 + $0x28] sm:$0xf8]
    %v85 = vld [vmem:[#allocation2 + $0x30] sm:$0xf8]
    %v86 = vld [vmem:[#allocation2 + $0x38] sm:$0xf8]
    %v87 = vld [vmem:[#allocation2 + $0x40] sm:$0xff]
    %v88 = vld [vmem:[#allocation2 + $0x48] sm:$0xff]
    %v89 = vld [vmem:[#allocation2 + $0x50] sm:$0xff]
    %v90 = vld [vmem:[#allocation2 + $0x58] sm:$0xff]
    %v91 = vld [vmem:[#allocation2 + $0x60] sm:$0xff]
    %v92 = vld [vmem:[#allocation2 + $0x68] sm:$0xff]
    %v93 = vld [vmem:[#allocation2 + $0x70] sm:$0xff]
    %v94 = vld [vmem:[#allocation2 + $0x78] sm:$0xff]
    %v95 = vld [vmem:[#allocation2 + $0x80] sm:$0xff]
    %v96 = vld [vmem:[#allocation2 + $0x88] sm:$0xff]
    %v97 = vld [vmem:[#allocation2 + $0x90] sm:$0xff]
    %v98 = vld [vmem:[#allocation2 + $0x98] sm:$0xff]
    %v99 = vld [vmem:[#allocation2 + $0xa0] sm:$0xff]
    %v100 = vld [vmem:[#allocation2 + $0xa8] sm:$0xff]
    %v101 = vld [vmem:[#allocation2 + $0xb0] sm:$0xff]
    %v102 = vld [vmem:[#allocation2 + $0xb8] sm:$0xff]
    %104 = vset.pattern.permute.xlu0 0
    %105 = vperm.xlu0 %104, %v76
    %v106 = vpop.permute.xlu0 %105
    %108 = vset.pattern.permute.xlu0 0
    %109 = vperm.xlu0 %108, %v77
    %v110 = vpop.permute.xlu0 %109
    %112 = vset.pattern.permute.xlu0 0
    %113 = vperm.xlu0 %112, %v78
    %v114 = vpop.permute.xlu0 %113
    %vm115 = vcmask 1042432
    %v116 = vrot.slane %v106, 5
    %v117 = vrot.slane %v110, 5
    %v118 = vsel %vm115, %v116, %v117
    %v119 = vrot.slane %v114, 5
    %v120 = vsel %vm115, %v117, %v119
    %v124 = vmul.f32 %v79, %v116
    %v125 = vmul.f32 %v80, %v116
    %v126 = vmul.f32 %v81, %v116
    %v127 = vmul.f32 %v82, %v116
    %v128 = vmul.f32 %v83, %v116
    %v129 = vmul.f32 %v84, %v116
    %v130 = vmul.f32 %v85, %v116
    %v131 = vmul.f32 %v86, %v116
    %v132 = vmul.f32 %v87, %v118
    %v133 = vmul.f32 %v88, %v118
    %v134 = vmul.f32 %v89, %v118
    %v135 = vmul.f32 %v90, %v118
    %v136 = vmul.f32 %v91, %v118
    %v137 = vmul.f32 %v92, %v118
    %v138 = vmul.f32 %v93, %v118
    %v139 = vmul.f32 %v94, %v118
    %v140 = vmul.f32 %v95, %v120
    %v141 = vmul.f32 %v96, %v120
    %v142 = vmul.f32 %v97, %v120
    %v143 = vmul.f32 %v98, %v120
    %v144 = vmul.f32 %v99, %v120
    %v145 = vmul.f32 %v100, %v120
    %v146 = vmul.f32 %v101, %v120
    %v147 = vmul.f32 %v102, %v120
    %vm172 = vcmask 1044480
    %v173 = vrot.slane %v124, 3
    %v174 = vrot.slane %v132, 3
    %v175 = vsel %vm172, %v173, %v174
    %v176 = vrot.slane %v125, 3
    %v177 = vrot.slane %v133, 3
    %v178 = vsel %vm172, %v176, %v177
    %v179 = vrot.slane %v126, 3
    %v180 = vrot.slane %v134, 3
    %v181 = vsel %vm172, %v179, %v180
    %v182 = vrot.slane %v127, 3
    %v183 = vrot.slane %v135, 3
    %v184 = vsel %vm172, %v182, %v183
    %v185 = vrot.slane %v128, 3
    %v186 = vrot.slane %v136, 3
    %v187 = vsel %vm172, %v185, %v186
    %v188 = vrot.slane %v129, 3
    %v189 = vrot.slane %v137, 3
    %v190 = vsel %vm172, %v188, %v189
    %v191 = vrot.slane %v130, 3
    %v192 = vrot.slane %v138, 3
    %v193 = vsel %vm172, %v191, %v192
    %v194 = vrot.slane %v131, 3
    %v195 = vrot.slane %v139, 3
    %v196 = vsel %vm172, %v194, %v195
    %v197 = vrot.slane %v140, 3
    %v198 = vsel %vm172, %v174, %v197
    %v199 = vrot.slane %v141, 3
    %v200 = vsel %vm172, %v177, %v199
    %v201 = vrot.slane %v142, 3
    %v202 = vsel %vm172, %v180, %v201
    %v203 = vrot.slane %v143, 3
    %v204 = vsel %vm172, %v183, %v203
    %v205 = vrot.slane %v144, 3
    %v206 = vsel %vm172, %v186, %v205
    %v207 = vrot.slane %v145, 3
    %v208 = vsel %vm172, %v189, %v207
    %v209 = vrot.slane %v146, 3
    %v210 = vsel %vm172, %v192, %v209
    %v211 = vrot.slane %v147, 3
    %v212 = vsel %vm172, %v195, %v211
    %237 = vst [vmem:[#allocation5] sm:$0xff] %v175
    %238 = vst [vmem:[#allocation5 + $0x8] sm:$0xff] %v178
    %239 = vst [vmem:[#allocation5 + $0x10] sm:$0xff] %v181
    %240 = vst [vmem:[#allocation5 + $0x18] sm:$0xff] %v184
    %241 = vst [vmem:[#allocation5 + $0x20] sm:$0xff] %v187
    %242 = vst [vmem:[#allocation5 + $0x28] sm:$0xff] %v190
    %243 = vst [vmem:[#allocation5 + $0x30] sm:$0xff] %v193
    %244 = vst [vmem:[#allocation5 + $0x38] sm:$0xff] %v196
    %245 = vst [vmem:[#allocation5 + $0x40] sm:$0xff] %v198
    %246 = vst [vmem:[#allocation5 + $0x48] sm:$0xff] %v200
    %247 = vst [vmem:[#allocation5 + $0x50] sm:$0xff] %v202
    %248 = vst [vmem:[#allocation5 + $0x58] sm:$0xff] %v204
    %249 = vst [vmem:[#allocation5 + $0x60] sm:$0xff] %v206
    %250 = vst [vmem:[#allocation5 + $0x68] sm:$0xff] %v208
    %251 = vst [vmem:[#allocation5 + $0x70] sm:$0xff] %v210
    %252 = vst [vmem:[#allocation5 + $0x78] sm:$0xff] %v212
    %253 = vst [vmem:[#allocation5 + $0x80] sm:$0x1f] %v197
    %254 = vst [vmem:[#allocation5 + $0x88] sm:$0x1f] %v199
    %255 = vst [vmem:[#allocation5 + $0x90] sm:$0x1f] %v201
    %256 = vst [vmem:[#allocation5 + $0x98] sm:$0x1f] %v203
    %257 = vst [vmem:[#allocation5 + $0xa0] sm:$0x1f] %v205
    %258 = vst [vmem:[#allocation5 + $0xa8] sm:$0x1f] %v207
    %259 = vst [vmem:[#allocation5 + $0xb0] sm:$0x1f] %v209
    %260 = vst [vmem:[#allocation5 + $0xb8] sm:$0x1f] %v211
    %261 = vst [vmem:[#allocation5 + $0x80] sm:$0xe0] 0.0
    %262 = vst [vmem:[#allocation5 + $0x88] sm:$0xe0] 0.0
    %263 = vst [vmem:[#allocation5 + $0x90] sm:$0xe0] 0.0
    %264 = vst [vmem:[#allocation5 + $0x98] sm:$0xe0] 0.0
    %265 = vst [vmem:[#allocation5 + $0xa0] sm:$0xe0] 0.0
    %266 = vst [vmem:[#allocation5 + $0xa8] sm:$0xe0] 0.0
    %267 = vst [vmem:[#allocation5 + $0xb0] sm:$0xe0] 0.0
    %268 = vst [vmem:[#allocation5 + $0xb8] sm:$0xe0] 0.0
    // Predicated region
    $region14: #{tpu_custom_call.1} parent=1 // pred_check
      _
    $region15: #{tpu_custom_call.1} parent=1 // pred_check_branch
      %270 = sbr.rel (0) target = $region17
    $region16: #{tpu_custom_call.1} parent=1 // pred_region
      %272 = vsyncadd [#allocation4], 0
      %s273 = sshll.u32 [#allocation5], 4
      %s274 = int_to_ptr.vmem [resolvable:$true] %s273
      %s275 = sshll.u32 %s2, 4
      %s276 = int_to_ptr.hbm [resolvable:$true] %s275
      %281 = dma.vmem_to_hbm [thread:$0]  %s274, 3072, %s276, [#allocation4], 1024, 1024, 64
    $region17: #{tpu_custom_call.1} parent=1 // pred_fallthru
      _
    // Predicated region
    $region18: #{tpu_custom_call.1} parent=1 // pred_check
      _
    $region19: #{tpu_custom_call.1} parent=1 // pred_check_branch
      %283 = sbr.rel (0) target = $region21
    $region20: #{tpu_custom_call.1} parent=1 // pred_region
      %285 = dma.done [#allocation4], 3072
    $region21: #{tpu_custom_call.1} parent=1 // pred_fallthru
      _
    %286 = vsyncpa [#allocation3], 1
    %287 = vsyncpa [#allocation4], 1

</llo_original>
